<compile_context>
chip_gen: v6e
topology: v6e:2x2x1
jax: 0.10.0
libtpu: 0.0.40
codegen_flags: <defaults>
</compile_context>

<pallas_src>
import jax
import jax.numpy as jnp
from jax.experimental import pallas as pl
from jax.experimental.pallas import tpu as pltpu


K = 128
EDGE_TYPES = 1024
_SQRT_2PI = (2.0 * 3.14159) ** 0.5  # matches the PyTorch constant (pi = 3.14159, NOT math.pi)


def _gaussian_kernel(xs_ref, const_ref, o_ref):
    # xs_ref    : (TM, 1) f32  -- fused mul*x + bias per row
    # const_ref : (8, K)  f32  -- row 0 = mean, row 1 = a, row 2 = coef (rows 3..7 padding)
    # o_ref     : (TM, K) out dtype
    mean = const_ref[0:1, :]                      # static slices: zero-cost ref views
    a = const_ref[1:2, :]
    coef = const_ref[2:3, :]
    d = xs_ref[...] - mean                        # (TM, K) via broadcast
    # body: 1 sub + 2 muls on the VPU, 1 exp on the EUP, 1 mul, cast, store.
    o_ref[...] = (jnp.exp(d * d * a) * coef).astype(o_ref.dtype)


def _round_up(n, m):
    return ((n + m - 1) // m) * m


def gaussian_layer_pallas(x, edge_types, means_w, stds_w, mul_w, bias_w, *, tm=8192):
    """x: [B, N, N] float, edge_types: [B, N, N] int32.

    means_w, stds_w: [1, K]; mul_w, bias_w: [EDGE_TYPES, 1].
    Returns [B, N, N, K] in means_w.dtype (matches the PyTorch `.type_as(self.means.weight)`).
    """
    B, N1, N2 = x.shape
    M = B * N1 * N2
    out_dtype = means_w.dtype

    # --- glue: embedding gathers + per-row affine, fused by XLA (plain JAX) ---
    # TODO(synk): optionally fold the 4 KiB mul_w/bias_w gathers into the kernel (VMEM-resident
    # tables) to drop the xs HBM round-trip; low priority (~2-3% of output traffic).
    et_flat = edge_types.reshape(M)
    xs = (mul_w[et_flat].astype(jnp.float32) * x.reshape(M, 1).astype(jnp.float32)
          + bias_w[et_flat].astype(jnp.float32))                          # (M, 1) f32

    # --- precompute basis constants once, packed into a single aligned (8, 128) tile ---
    std = jnp.abs(stds_w.reshape(1, K).astype(jnp.float32)) + 1e-5
    inv_std = 1.0 / std
    mean = means_w.reshape(1, K).astype(jnp.float32)
    a = -0.5 * inv_std * inv_std                                          # (1, K), a <= 0
    coef = inv_std / _SQRT_2PI                                            # (1, K)
    const = jnp.concatenate([mean, a, coef, jnp.zeros((5, K), jnp.float32)], axis=0)  # (8, K)

    # --- tile selection: big row tile, no padding (Pallas masks the partial last block) ---
    # tm=8192 -> 4 MiB f32 output block (~8-9 MiB double-buffered incl. xs); cap so the grid
    # keeps >= 4 steps (v7x has 2 TensorCores sharding the "parallel" axis).
    tm_eff = min(tm, _round_up(pl.cdiv(M, 4), 8))
    tm_eff = max(8, _round_up(tm_eff, 8))
    grid = (pl.cdiv(M, tm_eff),)

    cost = pl.CostEstimate(
        flops=5 * M * K,
        transcendentals=M * K,
        bytes_accessed=M * K * jnp.dtype(out_dtype).itemsize + M * 4 + 8 * K * 4,
    )

    out = pl.pallas_call(
        _gaussian_kernel,
        out_shape=jax.ShapeDtypeStruct((M, K), out_dtype),
        grid_spec=pltpu.PrefetchScalarGridSpec(
            num_scalar_prefetch=0,
            grid=grid,
            in_specs=[
                pl.BlockSpec((tm_eff, 1), lambda i: (i, 0)),   # xs (only per-row input)
                pl.BlockSpec((8, K), lambda i: (0, 0)),        # packed constants (replicated)
            ],
            out_specs=pl.BlockSpec((tm_eff, K), lambda i: (i, 0)),
        ),
        compiler_params=pltpu.CompilerParams(
            dimension_semantics=("parallel",),
            # 32 MiB scope: lets tm=8192 land on v5e (16 MiB default) and stays well inside
            # v7x's 64 MiB physical VMEM. Raise further only if sweeping tm >> 16384.
            vmem_limit_bytes=32 * 1024 * 1024,
        ),
        cost_estimate=cost,
    )(xs, const)

    return out.reshape(B, N1, N2, K)


def gaussian_layer_ref(x, edge_types, means_w, stds_w, mul_w, bias_w):
    """Pure-JAX reference mirroring the PyTorch forward."""
    mul = mul_w[edge_types]                   # (B, N, N, 1)
    bias = bias_w[edge_types]                 # (B, N, N, 1)
    xe = mul * x[..., None] + bias            # (B, N, N, 1)
    xe = jnp.broadcast_to(xe, xe.shape[:-1] + (K,)).astype(jnp.float32)
    mean = means_w.reshape(-1).astype(jnp.float32)
    std = jnp.abs(stds_w.reshape(-1).astype(jnp.float32)) + 1e-5
    out = jnp.exp(-0.5 * ((xe - mean) / std) ** 2) / (_SQRT_2PI * std)
    return out.astype(means_w.dtype)


if __name__ == "__main__":
    key = jax.random.PRNGKey(0)
    k_means, k_stds, k_x, k_et = jax.random.split(key, 4)

    # Deterministic parameter init matching nn.init in __init__:
    means_w = jax.random.uniform(k_means, (1, K), jnp.float32, 0.0, 3.0)
    stds_w = jax.random.uniform(k_stds, (1, K), jnp.float32, 0.0, 3.0)
    mul_w = jnp.ones((EDGE_TYPES, 1), jnp.float32)     # constant 1
    bias_w = jnp.zeros((EDGE_TYPES, 1), jnp.float32)   # constant 0

    # Small example inputs: batch=2, nodes=16 -> M = 2*16*16 = 512
    B, N = 2, 16
    x = jax.random.normal(k_x, (B, N, N), jnp.float32) * 2.0
    edge_types = jax.random.randint(k_et, (B, N, N), 0, EDGE_TYPES, jnp.int32)

    out = gaussian_layer_pallas(x, edge_types, means_w, stds_w, mul_w, bias_w)
    out = jax.block_until_ready(out)

    ref = gaussian_layer_ref(x, edge_types, means_w, stds_w, mul_w, bias_w)
    assert out.shape == (B, N, N, K), out.shape
    # f32 output: 1e-5 tolerance; loosen if means_w is bf16 (kernel then stores bf16 directly).
    assert jnp.allclose(out, ref, atol=1e-5, rtol=1e-5), "mismatch vs reference"

    print("KERNEL_OK")
</pallas_src>

<mosaic_0001>
module attributes {stable_mosaic.version = 11 : i64} {
  func.func @_gaussian_kernel(%arg0: i32, %arg1: memref<128x1xf32, #tpu.memory_space<vmem>>, %arg2: memref<8x128xf32, #tpu.memory_space<vmem>>, %arg3: memref<128x128xf32, #tpu.memory_space<vmem>>) attributes {dimension_semantics = [#tpu.dimension_semantics<parallel>], iteration_bounds = array<i64: 4>, scalar_prefetch = 0 : i64, scratch_operands = 0 : i64, tpu.core_type = #tpu.core_type<tc>, window_params = [{transform_indices = @transform_0, window_bounds = array<i64: 128, 1>}, {pipeline_mode = #tpu.pipeline_mode<synchronous>, transform_indices = @transform_1, window_bounds = array<i64: 8, 128>}, {transform_indices = @transform_2, window_bounds = array<i64: 128, 128>}]} {
    %c0 = arith.constant 0 : index
    %c0_0 = arith.constant 0 : index
    %0 = vector.load %arg2[%c0, %c0_0] : memref<8x128xf32, #tpu.memory_space<vmem>>, vector<1x128xf32>
    %c1 = arith.constant 1 : index
    %c0_1 = arith.constant 0 : index
    %1 = vector.load %arg2[%c1, %c0_1] : memref<8x128xf32, #tpu.memory_space<vmem>>, vector<1x128xf32>
    %c2 = arith.constant 2 : index
    %c0_2 = arith.constant 0 : index
    %2 = vector.load %arg2[%c2, %c0_2] : memref<8x128xf32, #tpu.memory_space<vmem>>, vector<1x128xf32>
    %c0_3 = arith.constant 0 : index
    %c0_4 = arith.constant 0 : index
    %3 = vector.load %arg1[%c0_3, %c0_4] : memref<128x1xf32, #tpu.memory_space<vmem>>, vector<128x1xf32>
    %4 = vector.broadcast %3 : vector<128x1xf32> to vector<128x128xf32>
    %5 = vector.broadcast %0 : vector<1x128xf32> to vector<128x128xf32>
    %6 = arith.subf %4, %5 : vector<128x128xf32>
    %7 = arith.mulf %6, %6 : vector<128x128xf32>
    %8 = vector.broadcast %1 : vector<1x128xf32> to vector<128x128xf32>
    %9 = arith.mulf %7, %8 : vector<128x128xf32>
    %10 = math.exp %9 : vector<128x128xf32>
    %11 = vector.broadcast %2 : vector<1x128xf32> to vector<128x128xf32>
    %12 = arith.mulf %10, %11 : vector<128x128xf32>
    %c0_5 = arith.constant 0 : index
    %c0_6 = arith.constant 0 : index
    %13 = vector.load %arg3[%c0_5, %c0_6] : memref<128x128xf32, #tpu.memory_space<vmem>>, vector<128x128xf32>
    tpu.vector_store %arg3[%c0_5, %c0_6], %12 {strides = array<i32>} : memref<128x128xf32, #tpu.memory_space<vmem>>, vector<128x128xf32>,
    return
  }
  func.func @transform_0(%arg0: i32) -> (i32, i32) {
    %c0_i32 = arith.constant 0 : i32
    %c0_i32_0 = arith.constant 0 : i32
    return %arg0, %c0_i32 : i32, i32
  }
  func.func @transform_1(%arg0: i32) -> (i32, i32) {
    %c0_i32 = arith.constant 0 : i32
    %c0_i32_0 = arith.constant 0 : i32
    %c0_i32_1 = arith.constant 0 : i32
    return %c0_i32, %c0_i32_0 : i32, i32
  }
  func.func @transform_2(%arg0: i32) -> (i32, i32) {
    %c0_i32 = arith.constant 0 : i32
    %c0_i32_0 = arith.constant 0 : i32
    return %arg0, %c0_i32 : i32, i32
  }
}

</mosaic_0001>

<llo_original>
// kernel: tpu_custom_call.1
$region0: #{tpu_custom_call.1}
  #allocation0 [shape = 'u32[]', space=smem, size = 0x4, offset = 0x4, fixed_abs, tag = 'smem constant byte address 0x4 - core index']
  #allocation1 [shape = 'u32[144,128]{1,0:T(1,128)}', space=vmem, size = 0x12000, scoped, tag = 'internal scratch']
  %s0 = inlined_call_operand.vmem [shape: f32[512,1], index: 0, kind: input, shape index: {}]
  %s1 = inlined_call_operand.vmem [shape: f32[8,128], index: 1, kind: input, shape index: {}]
  %s2 = inlined_call_operand.hbm [shape: f32[512,128], index: 2, kind: output, shape index: {}]
  %s3 = sld [smem:[#allocation0]]
  $region41: #{tpu_custom_call.1} parent=0
    _
  %s5 = ssub.s32 1, %s3
  %s6 = scalar_select 0, %s5, %s3
  $region1: #{tpu_custom_call.1} parent=0
    #allocation2 [shape = 'u8[131072]{0}', space=vmem, size = 0x20000, scoped, tag = 'output window, operand 0']
    #allocation3 [shape = 's32[2]{0}', space=sflag, size = 0x8, scoped, tag = 'scoped memory for tpu_custom_call.1']
    %7 = vsyncpa [#allocation3], 0
    %s8 = scalar_lea.sflag [#allocation3], 1
    %9 = vsyncpa %s8, 0
    loop: start=0, step=1, limit=6
    $region2: #{tpu_custom_call.1} parent=1 // loop_pre_header
      _
    $region3: #{tpu_custom_call.1} parent=1 // loop_header
      %s11 = sphi 0, %s15
      %p12 = scmp.ge.s32.totalorder %s11, 6
      %s21 = sphi 0, %s23
      %s24 = sphi 0, %s21
      %s25 = sphi 0, %s24
      %s41 = sphi 0, %s25
      %s45 = sphi 0, %s45
      %s47 = sphi 0, %s45
      %s48 = sphi 0, %s47
      %s62 = sphi 0, %s48
      %s68 = sphi 0, %s70
      %s71 = sphi 0, %s68
      %s72 = sphi 0, %s71
      %s88 = sphi 0, %s72
    $region4: #{tpu_custom_call.1} parent=1 // loop_header_branch
      %14 = sbr.rel (%p12) target = $region8
    $region5: #{tpu_custom_call.1} parent=1 // loop_body
      %s16 = ssub.s32 %s11, 1
      %s17 = ssub.s32 %s11, 2
      %s18 = sadd.s32 %s11, 1
      %s19 = ssub.s32 %s11, %s18
      %p20 = scmp.eq.s32.totalorder %s19, 0
      %s22 = sadd.s32 %s21, 1
      %s23 = scalar_select %p20, %s21, %s22
      %p26 = pneg %p20
      %p27 = scmp.eq.s32.totalorder %s11, 3
      %p28 = por %p26, %p27
      %p29 = scmp.ne.s32.totalorder %s21, %s24
      %p30 = scmp.eq.s32.totalorder %s11, 0
      %p31 = por %p29, %p30
      %p32 = scmp.ne.s32.totalorder %s21, %s24
      %p33 = scmp.eq.s32.totalorder %s16, 3
      %p34 = por %p32, %p33
      %p35 = scmp.ne.s32.totalorder %s24, %s25
      %p36 = scmp.eq.s32.totalorder %s16, 0
      %p37 = por %p35, %p36
      %p38 = scmp.ne.s32.totalorder %s24, %s25
      %p39 = scmp.eq.s32.totalorder %s17, 3
      %p40 = por %p38, %p39
      %p42 = scmp.ne.s32.totalorder %s25, %s41
      %p43 = scmp.eq.s32.totalorder %s17, 0
      %p44 = por %p42, %p43
      %s46 = sadd.s32 %s45, 1
      %p49 = scmp.eq.s32.totalorder %s11, 3
      %p50 = scmp.ne.s32.totalorder %s45, %s47
      %p51 = scmp.eq.s32.totalorder %s11, 0
      %p52 = por %p50, %p51
      %p53 = scmp.ne.s32.totalorder %s45, %s47
      %p54 = scmp.eq.s32.totalorder %s16, 3
      %p55 = por %p53, %p54
      %p56 = scmp.ne.s32.totalorder %s47, %s48
      %p57 = scmp.eq.s32.totalorder %s16, 0
      %p58 = por %p56, %p57
      %p59 = scmp.ne.s32.totalorder %s47, %s48
      %p60 = scmp.eq.s32.totalorder %s17, 3
      %p61 = por %p59, %p60
      %p63 = scmp.ne.s32.totalorder %s48, %s62
      %p64 = scmp.eq.s32.totalorder %s17, 0
      %p65 = por %p63, %p64
      %s66 = ssub.s32 %s11, %s18
      %p67 = scmp.eq.s32.totalorder %s66, 0
      %s69 = sadd.s32 %s68, 1
      %s70 = scalar_select %p67, %s68, %s69
      %p73 = pneg %p67
      %p74 = scmp.eq.s32.totalorder %s11, 3
      %p75 = por %p73, %p74
      %p76 = scmp.ne.s32.totalorder %s68, %s71
      %p77 = scmp.eq.s32.totalorder %s11, 0
      %p78 = por %p76, %p77
      %p79 = scmp.ne.s32.totalorder %s68, %s71
      %p80 = scmp.eq.s32.totalorder %s16, 3
      %p81 = por %p79, %p80
      %p82 = scmp.ne.s32.totalorder %s71, %s72
      %p83 = scmp.eq.s32.totalorder %s16, 0
      %p84 = por %p82, %p83
      %p85 = scmp.ne.s32.totalorder %s71, %s72
      %p86 = scmp.eq.s32.totalorder %s17, 3
      %p87 = por %p85, %p86
      %p89 = scmp.ne.s32.totalorder %s72, %s88
      %p90 = scmp.eq.s32.totalorder %s17, 0
      %p91 = por %p89, %p90
      %p92 = scmp.le.s32.totalorder 1, %s11
      %p93 = scmp.lt.s32.totalorder %s11, 5
      %p94 = pnand %p92, %p93
      %p95 = pneg %p94
      // Predicated region
      $region9: #{tpu_custom_call.1} parent=5 // pred_check
        _
      $region10: #{tpu_custom_call.1} parent=5 // pred_check_branch
        %97 = sbr.rel (%p94) target = $region12
      $region11: #{tpu_custom_call.1} parent=5 // pred_region
        %s98 = ssub.s32 %s11, 1
        // Predicated region
        $region13: #{tpu_custom_call.1} parent=11 // pred_check
          %p99 = pneg %p58
        $region14: #{tpu_custom_call.1} parent=11 // pred_check_branch
          %101 = sbr.rel (%p99) target = $region16
        $region15: #{tpu_custom_call.1} parent=11 // pred_region
          _
        $region16: #{tpu_custom_call.1} parent=11 // pred_fallthru
          _
      $region12: #{tpu_custom_call.1} parent=5 // pred_fallthru
        _
      %p102 = scmp.lt.s32.totalorder %s11, 4
      // Predicated region
      $region17: #{tpu_custom_call.1} parent=5 // pred_check
        %p103 = pneg %p102
      $region18: #{tpu_custom_call.1} parent=5 // pred_check_branch
        %105 = sbr.rel (%p103) target = $region20
      $region19: #{tpu_custom_call.1} parent=5 // pred_region
        // Predicated region
        $region21: #{tpu_custom_call.1} parent=19 // pred_check
          %p106 = pneg %p31
        $region22: #{tpu_custom_call.1} parent=19 // pred_check_branch
          %108 = sbr.rel (%p106) target = $region24
        $region23: #{tpu_custom_call.1} parent=19 // pred_region
          %s109 = smul.u32 16, %s11
          %p110 = scmp.lt.s32.totalorder %s109, 63
          %s111 = scalar_select %p110, %s109, 63
          %s112 = smul.addr %s111, 8
          %s113 = scalar_lea.vmem %s0, %s112
          %s114 = smul.u32 16, %s11
        $region24: #{tpu_custom_call.1} parent=19 // pred_fallthru
          _
      $region20: #{tpu_custom_call.1} parent=5 // pred_fallthru
        _
      %p115 = scmp.le.s32.totalorder 1, %s11
      %p116 = scmp.lt.s32.totalorder %s11, 5
      %p117 = pnand %p115, %p116
      %p118 = pneg %p117
      // Predicated region
      $region25: #{tpu_custom_call.1} parent=5 // pred_check
        _
      $region26: #{tpu_custom_call.1} parent=5 // pred_check_branch
        %120 = sbr.rel (%p117) target = $region28
      $region27: #{tpu_custom_call.1} parent=5 // pred_region
        %s121 = ssub.s32 %s11, 1
        %s122 = smul.u32 16, %s16
        %p123 = scmp.lt.s32.totalorder %s122, 63
        %s124 = scalar_select %p123, %s122, 63
        %s125 = smul.addr %s124, 8
        %s126 = scalar_lea.vmem %s0, %s125
        %p127 = pneg %p37
        %p128 = pneg %p34
        %p129 = pneg %p58
        %p130 = pneg %p55
        %p131 = pneg %p84
        %p132 = pneg %p81
        %s133 = sand.u32 %s71, 1
        %s134 = scalar_lea.sflag [#allocation3], %s133
        %s135 = sand.u32 %s71, 1
        %s136 = smul.addr %s135, 128
        %s137 = scalar_lea.vmem [#allocation2], %s136
        %s138 = smul.u32 16, %s16
        %p139 = scmp.lt.s32.totalorder %s138, 63
        %s140 = scalar_select %p139, %s138, 63
        %s141 = smul.addr %s140, 8
        %s142 = scalar_lea.vmem %s0, %s141
        %s143 = smul.u32 16, %s16
        %s144 = smul.u32 16, %s16
        %v145 = vld [vmem:[%s1] sm:$0x1]
        %v146 = vld [vmem:[%s1 + $0x1] sm:$0x1]
        %v147 = vld [vmem:[%s1 + $0x2] sm:$0x1]
        %v148 = vld [vmem:[%s142] sm:$0xff]
        %v149 = vld [vmem:[%s142 + $0x8] sm:$0xff]
        %v150 = vld [vmem:[%s142 + $0x10] sm:$0xff]
        %v151 = vld [vmem:[%s142 + $0x18] sm:$0xff]
        %v152 = vld [vmem:[%s142 + $0x20] sm:$0xff]
        %v153 = vld [vmem:[%s142 + $0x28] sm:$0xff]
        %v154 = vld [vmem:[%s142 + $0x30] sm:$0xff]
        %v155 = vld [vmem:[%s142 + $0x38] sm:$0xff]
        %v156 = vld [vmem:[%s142 + $0x40] sm:$0xff]
        %v157 = vld [vmem:[%s142 + $0x48] sm:$0xff]
        %v158 = vld [vmem:[%s142 + $0x50] sm:$0xff]
        %v159 = vld [vmem:[%s142 + $0x58] sm:$0xff]
        %v160 = vld [vmem:[%s142 + $0x60] sm:$0xff]
        %v161 = vld [vmem:[%s142 + $0x68] sm:$0xff]
        %v162 = vld [vmem:[%s142 + $0x70] sm:$0xff]
        %v163 = vld [vmem:[%s142 + $0x78] sm:$0xff]
        %165 = vset.pattern.permute.xlu0 0
        %166 = vperm.xlu0 %165, %v148
        %v167 = vpop.permute.xlu0 %166
        %170 = vset.pattern.permute.xlu0 0
        %171 = vperm.xlu0 %170, %v149
        %v172 = vpop.permute.xlu0 %171
        %175 = vset.pattern.permute.xlu0 0
        %176 = vperm.xlu0 %175, %v150
        %v177 = vpop.permute.xlu0 %176
        %180 = vset.pattern.permute.xlu0 0
        %181 = vperm.xlu0 %180, %v151
        %v182 = vpop.permute.xlu0 %181
        %185 = vset.pattern.permute.xlu0 0
        %186 = vperm.xlu0 %185, %v152
        %v187 = vpop.permute.xlu0 %186
        %190 = vset.pattern.permute.xlu0 0
        %191 = vperm.xlu0 %190, %v153
        %v192 = vpop.permute.xlu0 %191
        %195 = vset.pattern.permute.xlu0 0
        %196 = vperm.xlu0 %195, %v154
        %v197 = vpop.permute.xlu0 %196
        %200 = vset.pattern.permute.xlu0 0
        %201 = vperm.xlu0 %200, %v155
        %v202 = vpop.permute.xlu0 %201
        %205 = vset.pattern.permute.xlu0 0
        %206 = vperm.xlu0 %205, %v156
        %v207 = vpop.permute.xlu0 %206
        %210 = vset.pattern.permute.xlu0 0
        %211 = vperm.xlu0 %210, %v157
        %v212 = vpop.permute.xlu0 %211
        %215 = vset.pattern.permute.xlu0 0
        %216 = vperm.xlu0 %215, %v158
        %v217 = vpop.permute.xlu0 %216
        %220 = vset.pattern.permute.xlu0 0
        %221 = vperm.xlu0 %220, %v159
        %v222 = vpop.permute.xlu0 %221
        %225 = vset.pattern.permute.xlu0 0
        %226 = vperm.xlu0 %225, %v160
        %v227 = vpop.permute.xlu0 %226
        %230 = vset.pattern.permute.xlu0 0
        %231 = vperm.xlu0 %230, %v161
        %v232 = vpop.permute.xlu0 %231
        %235 = vset.pattern.permute.xlu0 0
        %236 = vperm.xlu0 %235, %v162
        %v237 = vpop.permute.xlu0 %236
        %240 = vset.pattern.permute.xlu0 0
        %241 = vperm.xlu0 %240, %v163
        %v242 = vpop.permute.xlu0 %241
        %v244 = vlaneseq
        %v245 = vshrl.u32 %v244, 7
        %v246 = vsub.s32 0, %v245
        %v247 = vrot.slane %v145, %v246
        %v248 = vsub.f32 %v167, %v247
        %v249 = vsub.f32 %v172, %v247
        %v250 = vsub.f32 %v177, %v247
        %v251 = vsub.f32 %v182, %v247
        %v252 = vsub.f32 %v187, %v247
        %v253 = vsub.f32 %v192, %v247
        %v254 = vsub.f32 %v197, %v247
        %v255 = vsub.f32 %v202, %v247
        %v256 = vsub.f32 %v207, %v247
        %v257 = vsub.f32 %v212, %v247
        %v258 = vsub.f32 %v217, %v247
        %v259 = vsub.f32 %v222, %v247
        %v260 = vsub.f32 %v227, %v247
        %v261 = vsub.f32 %v232, %v247
        %v262 = vsub.f32 %v237, %v247
        %v263 = vsub.f32 %v242, %v247
        %v264 = vmul.f32 %v248, %v248
        %v265 = vmul.f32 %v249, %v249
        %v266 = vmul.f32 %v250, %v250
        %v267 = vmul.f32 %v251, %v251
        %v268 = vmul.f32 %v252, %v252
        %v269 = vmul.f32 %v253, %v253
        %v270 = vmul.f32 %v254, %v254
        %v271 = vmul.f32 %v255, %v255
        %v272 = vmul.f32 %v256, %v256
        %v273 = vmul.f32 %v257, %v257
        %v274 = vmul.f32 %v258, %v258
        %v275 = vmul.f32 %v259, %v259
        %v276 = vmul.f32 %v260, %v260
        %v277 = vmul.f32 %v261, %v261
        %v278 = vmul.f32 %v262, %v262
        %v279 = vmul.f32 %v263, %v263
        %v280 = vlaneseq
        %v281 = vshrl.u32 %v280, 7
        %v282 = vsub.s32 0, %v281
        %v283 = vrot.slane %v146, %v282
        %v284 = vmul.f32 %v264, %v283
        %v285 = vmul.f32 %v265, %v283
        %v286 = vmul.f32 %v266, %v283
        %v287 = vmul.f32 %v267, %v283
        %v288 = vmul.f32 %v268, %v283
        %v289 = vmul.f32 %v269, %v283
        %v290 = vmul.f32 %v270, %v283
        %v291 = vmul.f32 %v271, %v283
        %v292 = vmul.f32 %v272, %v283
        %v293 = vmul.f32 %v273, %v283
        %v294 = vmul.f32 %v274, %v283
        %v295 = vmul.f32 %v275, %v283
        %v296 = vmul.f32 %v276, %v283
        %v297 = vmul.f32 %v277, %v283
        %v298 = vmul.f32 %v278, %v283
        %v299 = vmul.f32 %v279, %v283
        %v300 = vmul.f32 %v284, 1.442695
        %v301 = vpow.pop %v300
        %v302 = vmul.f32 %v285, 1.442695
        %v303 = vpow.pop %v302
        %v304 = vmul.f32 %v286, 1.442695
        %v305 = vpow.pop %v304
        %v306 = vmul.f32 %v287, 1.442695
        %v307 = vpow.pop %v306
        %v308 = vmul.f32 %v288, 1.442695
        %v309 = vpow.pop %v308
        %v310 = vmul.f32 %v289, 1.442695
        %v311 = vpow.pop %v310
        %v312 = vmul.f32 %v290, 1.442695
        %v313 = vpow.pop %v312
        %v314 = vmul.f32 %v291, 1.442695
        %v315 = vpow.pop %v314
        %v316 = vmul.f32 %v292, 1.442695
        %v317 = vpow.pop %v316
        %v318 = vmul.f32 %v293, 1.442695
        %v319 = vpow.pop %v318
        %v320 = vmul.f32 %v294, 1.442695
        %v321 = vpow.pop %v320
        %v322 = vmul.f32 %v295, 1.442695
        %v323 = vpow.pop %v322
        %v324 = vmul.f32 %v296, 1.442695
        %v325 = vpow.pop %v324
        %v326 = vmul.f32 %v297, 1.442695
        %v327 = vpow.pop %v326
        %v328 = vmul.f32 %v298, 1.442695
        %v329 = vpow.pop %v328
        %v330 = vmul.f32 %v299, 1.442695
        %v331 = vpow.pop %v330
        %v332 = vlaneseq
        %v333 = vshrl.u32 %v332, 7
        %v334 = vsub.s32 0, %v333
        %v335 = vrot.slane %v147, %v334
        %v336 = vmul.f32 %v301, %v335
        %v337 = vmul.f32 %v303, %v335
        %v338 = vmul.f32 %v305, %v335
        %v339 = vmul.f32 %v307, %v335
        %v340 = vmul.f32 %v309, %v335
        %v341 = vmul.f32 %v311, %v335
        %v342 = vmul.f32 %v313, %v335
        %v343 = vmul.f32 %v315, %v335
        %v344 = vmul.f32 %v317, %v335
        %v345 = vmul.f32 %v319, %v335
        %v346 = vmul.f32 %v321, %v335
        %v347 = vmul.f32 %v323, %v335
        %v348 = vmul.f32 %v325, %v335
        %v349 = vmul.f32 %v327, %v335
        %v350 = vmul.f32 %v329, %v335
        %v351 = vmul.f32 %v331, %v335
        %352 = vst [vmem:[%s137] sm:$0xff] %v336
        %353 = vst [vmem:[%s137 + $0x8] sm:$0xff] %v337
        %354 = vst [vmem:[%s137 + $0x10] sm:$0xff] %v338
        %355 = vst [vmem:[%s137 + $0x18] sm:$0xff] %v339
        %356 = vst [vmem:[%s137 + $0x20] sm:$0xff] %v340
        %357 = vst [vmem:[%s137 + $0x28] sm:$0xff] %v341
        %358 = vst [vmem:[%s137 + $0x30] sm:$0xff] %v342
        %359 = vst [vmem:[%s137 + $0x38] sm:$0xff] %v343
        %360 = vst [vmem:[%s137 + $0x40] sm:$0xff] %v344
        %361 = vst [vmem:[%s137 + $0x48] sm:$0xff] %v345
        %362 = vst [vmem:[%s137 + $0x50] sm:$0xff] %v346
        %363 = vst [vmem:[%s137 + $0x58] sm:$0xff] %v347
        %364 = vst [vmem:[%s137 + $0x60] sm:$0xff] %v348
        %365 = vst [vmem:[%s137 + $0x68] sm:$0xff] %v349
        %366 = vst [vmem:[%s137 + $0x70] sm:$0xff] %v350
        %367 = vst [vmem:[%s137 + $0x78] sm:$0xff] %v351
        %s368 = sand.u32 %s71, 1
        %s369 = scalar_lea.sflag [#allocation3], %s368
        %s370 = sand.u32 %s71, 1
        %s371 = smul.addr %s370, 128
        %s372 = scalar_lea.vmem [#allocation2], %s371
        // Predicated region
        $region29: #{tpu_custom_call.1} parent=27 // pred_check
          %p373 = pneg %p81
        $region30: #{tpu_custom_call.1} parent=27 // pred_check_branch
          %375 = sbr.rel (%p373) target = $region32
        $region31: #{tpu_custom_call.1} parent=27 // pred_region
          %s376 = smul.u32 16, %s16
          %s378 = ssub.s32 2048, 2048
          %379 = vsyncadd %s369, %s378
          %s380 = smul.addr %s376, 128
          %s381 = scalar_lea.hbm %s2, %s380
          %s382 = sshll.u32 %s372, 4
          %s383 = int_to_ptr.vmem [resolvable:$true] %s382
          %388 = dma.vmem_to_hbm [thread:$0]  %s383, 2048, %s381, %s369, 128, 128, 8
        $region32: #{tpu_custom_call.1} parent=27 // pred_fallthru
          _
      $region28: #{tpu_custom_call.1} parent=5 // pred_fallthru
        _
      %p389 = scmp.le.s32.totalorder 2, %s11
      // Predicated region
      $region33: #{tpu_custom_call.1} parent=5 // pred_check
        %p390 = pneg %p389
      $region34: #{tpu_custom_call.1} parent=5 // pred_check_branch
        %392 = sbr.rel (%p390) target = $region36
      $region35: #{tpu_custom_call.1} parent=5 // pred_region
        %s393 = ssub.s32 %s11, 2
        // Predicated region
        $region37: #{tpu_custom_call.1} parent=35 // pred_check
          %p394 = pneg %p87
        $region38: #{tpu_custom_call.1} parent=35 // pred_check_branch
          %396 = sbr.rel (%p394) target = $region40
        $region39: #{tpu_custom_call.1} parent=35 // pred_region
          %s397 = sand.u32 %s72, 1
          %s398 = scalar_lea.sflag [#allocation3], %s397
          %s399 = sand.u32 %s72, 1
          %s400 = smul.addr %s399, 128
          %s401 = scalar_lea.vmem [#allocation2], %s400
          %402 = dma.done %s398, 2048
        $region40: #{tpu_custom_call.1} parent=35 // pred_fallthru
          _
      $region36: #{tpu_custom_call.1} parent=5 // pred_fallthru
        _
    $region6: #{tpu_custom_call.1} parent=1 // loop_footer
      %s15 = sadd.s32 1, %s11
    $region7: #{tpu_custom_call.1} parent=1 // loop_footer_branch
      %10 = sbr.rel target = $region3
    $region8: #{tpu_custom_call.1} parent=1 // loop_exit
      _
    %403 = vsyncpa [#allocation3], 1
    %s404 = scalar_lea.sflag [#allocation3], 1
    %405 = vsyncpa %s404, 1

</llo_original>
